<compile_context>
chip_gen: v7x
topology: tpu7x:2x2x1
jax: 0.10.0
libtpu: 0.0.40
codegen_flags: <defaults>
</compile_context>

<pallas_src>
import math
import functools

import jax
import jax.numpy as jnp
from jax.experimental import pallas as pl
from jax.experimental.pallas import tpu as pltpu


# ---------------------------------------------------------------------------
# Kernels (operate on a lane-dense 2-D view: rows = batch, cols = seq*d_model)
# ---------------------------------------------------------------------------

def add_pe_kernel(x_ref, pe_ref, o_ref):
    """Eval / p == 0 path: out = x + pos_encoding (broadcast over batch rows)."""
    o_ref[...] = (x_ref[...] + pe_ref[...]).astype(o_ref.dtype)


def add_pe_dropout_kernel(x_ref, pe_ref, bits1_ref, bits2_ref, o_ref, *,
                          threshold, inv_keep):
    """Training path: out = drop(x + drop(pe)).

    Keep decision: raw uint32 bits >= integer threshold  (keep prob = 1 - p).
    bits1 is (1, tn): one encoding mask shared across all batch rows/tiles.
    bits2 is (tb, tn): per-element mask for the second dropout.
    """
    thr = jnp.uint32(threshold)
    pe = pe_ref[...]                                          # (1, tn)
    enc = jnp.where(bits1_ref[...] >= thr, pe * inv_keep, 0.0)
    y = x_ref[...] + enc                                      # broadcast over rows
    y = jnp.where(bits2_ref[...] >= thr, y * inv_keep, 0.0)
    o_ref[...] = y.astype(o_ref.dtype)


# ---------------------------------------------------------------------------
# Tiling helpers
# ---------------------------------------------------------------------------

_ROW_TILE_CAP = 64       # sublane-axis (batch) tile cap
_LANE_TILE_CAP = 4096    # lane-axis tile cap: 64*4096*4B = 1 MiB per f32 buffer


def _pick_tile(dim, unit, cap):
    """Largest tile that divides `dim`, is a multiple of `unit`, and <= cap.

    Falls back to the full dim when `dim` is not a multiple of `unit`
    (a block dim equal to the full array dim is always legal).
    """
    if dim % unit != 0:
        return dim
    t = min(dim, max(unit, (cap // unit) * unit))
    while dim % t:
        t -= unit
    return t


def _make_dropout_bits(seed, batch, n):
    k1, k2 = jax.random.split(jax.random.PRNGKey(seed))
    bits1 = jax.random.bits(k1, (1, n), dtype=jnp.uint32)       # shared over batch
    bits2 = jax.random.bits(k2, (batch, n), dtype=jnp.uint32)   # per element
    return bits1, bits2


def _threshold(p):
    return min(int(round(p * (1 << 32))), (1 << 32) - 1)


# ---------------------------------------------------------------------------
# Positional-encoding table (same math as the PyTorch __init__)
# ---------------------------------------------------------------------------

def make_pos_encodings(max_len, d_model):
    position = jnp.arange(max_len, dtype=jnp.float32)[:, None]               # (L, 1)
    div_term = jnp.exp(
        jnp.arange(0, d_model, 2, dtype=jnp.float32) * (-math.log(10000.0) / d_model)
    )                                                                         # (D/2,)
    pe = jnp.zeros((max_len, d_model), dtype=jnp.float32)
    pe = pe.at[:, 0::2].set(jnp.sin(position * div_term))
    pe = pe.at[:, 1::2].set(jnp.cos(position * div_term))
    return pe


# ---------------------------------------------------------------------------
# Forward wrapper
# ---------------------------------------------------------------------------

def positional_encoding_forward(x, pos_encodings, dropout_rate, seed=0):
    """x: (B, S, D). Returns dropout(x + dropout(pos_encodings[:S]))."""
    B, S, D = x.shape
    N = S * D
    p = float(dropout_rate)

    x2 = x.reshape(B, N)                                  # lane-dense 2-D view
    pe2 = pos_encodings[:S].astype(x.dtype).reshape(1, N)

    tb = _pick_tile(B, 8, _ROW_TILE_CAP)
    tn = _pick_tile(N, 128, _LANE_TILE_CAP)
    grid = (B // tb, N // tn)

    compiler_params = pltpu.CompilerParams(
        dimension_semantics=("parallel", "parallel"))

    x_spec = pl.BlockSpec((tb, tn), lambda i, j: (i, j))
    row_spec = pl.BlockSpec((1, tn), lambda i, j: (0, j))
    out_spec = pl.BlockSpec((tb, tn), lambda i, j: (i, j))
    out_shape = jax.ShapeDtypeStruct((B, N), x.dtype)

    if p > 0.0:
        bits1, bits2 = _make_dropout_bits(seed, B, N)
        kernel = functools.partial(
            add_pe_dropout_kernel,
            threshold=_threshold(p),
            inv_keep=1.0 / (1.0 - p),
        )
        out2 = pl.pallas_call(
            kernel,
            out_shape=out_shape,
            grid_spec=pltpu.PrefetchScalarGridSpec(
                num_scalar_prefetch=0,
                grid=grid,
                in_specs=[x_spec, row_spec, row_spec, x_spec],
                out_specs=out_spec,
            ),
            compiler_params=compiler_params,
        )(x2, pe2, bits1, bits2)
    else:
        out2 = pl.pallas_call(
            add_pe_kernel,
            out_shape=out_shape,
            grid_spec=pltpu.PrefetchScalarGridSpec(
                num_scalar_prefetch=0,
                grid=grid,
                in_specs=[x_spec, row_spec],
                out_specs=out_spec,
            ),
            compiler_params=compiler_params,
        )(x2, pe2)

    return out2.reshape(B, S, D)


# ---------------------------------------------------------------------------
# Pure-JAX reference (bit-identical math to the kernel)
# ---------------------------------------------------------------------------

def _reference_forward(x, pos_encodings, dropout_rate, seed=0):
    B, S, D = x.shape
    p = float(dropout_rate)
    pe = pos_encodings[:S].astype(x.dtype)
    if p == 0.0:
        return x + pe[None]
    bits1, bits2 = _make_dropout_bits(seed, B, S * D)
    thr = jnp.uint32(_threshold(p))
    inv_keep = 1.0 / (1.0 - p)
    enc = jnp.where(bits1.reshape(S, D) >= thr, pe * inv_keep, 0.0)
    y = x + enc[None]
    return jnp.where(bits2.reshape(B, S, D) >= thr, y * inv_keep, 0.0).astype(x.dtype)


if __name__ == "__main__":
    # Small shapes consistent with the module's forward: x is (B, S, D).
    batch, seq_len, d_model, max_len = 2, 8, 32, 16
    dropout_rate = 0.1

    key = jax.random.PRNGKey(0)
    x = jax.random.normal(key, (batch, seq_len, d_model), dtype=jnp.float32)
    pe_table = make_pos_encodings(max_len, d_model)

    # --- eval-mode path (p = 0): exact broadcast-add check ---
    out0 = positional_encoding_forward(x, pe_table, dropout_rate=0.0)
    out0 = jax.block_until_ready(out0)
    ref0 = x + pe_table[:seq_len][None, :, :]
    assert out0.shape == (batch, seq_len, d_model)
    assert jnp.allclose(out0, ref0, atol=1e-6), "p=0 path mismatch"

    # --- training path with dropout: compare against bit-identical reference ---
    out1 = positional_encoding_forward(x, pe_table, dropout_rate=dropout_rate, seed=1234)
    out1 = jax.block_until_ready(out1)
    ref1 = _reference_forward(x, pe_table, dropout_rate=dropout_rate, seed=1234)
    assert out1.shape == (batch, seq_len, d_model)
    assert jnp.all(jnp.isfinite(out1))
    assert jnp.allclose(out1, ref1, atol=1e-6, rtol=1e-6), "dropout path mismatch"

    print("KERNEL_OK")
</pallas_src>

<mosaic_0001>
module attributes {stable_mosaic.version = 11 : i64} {
  func.func @add_pe_kernel(%arg0: i32, %arg1: i32, %arg2: memref<2x256xf32, #tpu.memory_space<vmem>>, %arg3: memref<1x256xf32, #tpu.memory_space<vmem>>, %arg4: memref<2x256xf32, #tpu.memory_space<vmem>>) attributes {dimension_semantics = [#tpu.dimension_semantics<parallel>, #tpu.dimension_semantics<parallel>], iteration_bounds = array<i64: 1, 1>, scalar_prefetch = 0 : i64, scratch_operands = 0 : i64, tpu.core_type = #tpu.core_type<tc>, window_params = [{transform_indices = @transform_0, window_bounds = array<i64: 2, 256>}, {transform_indices = @transform_1, window_bounds = array<i64: 1, 256>}, {transform_indices = @transform_2, window_bounds = array<i64: 2, 256>}]} {
    %c0 = arith.constant 0 : index
    %c0_0 = arith.constant 0 : index
    %0 = vector.load %arg2[%c0, %c0_0] : memref<2x256xf32, #tpu.memory_space<vmem>>, vector<2x256xf32>
    %c0_1 = arith.constant 0 : index
    %c0_2 = arith.constant 0 : index
    %1 = vector.load %arg3[%c0_1, %c0_2] : memref<1x256xf32, #tpu.memory_space<vmem>>, vector<1x256xf32>
    %2 = vector.broadcast %1 : vector<1x256xf32> to vector<2x256xf32>
    %3 = arith.addf %0, %2 : vector<2x256xf32>
    %c0_3 = arith.constant 0 : index
    %c0_4 = arith.constant 0 : index
    %4 = vector.load %arg4[%c0_3, %c0_4] : memref<2x256xf32, #tpu.memory_space<vmem>>, vector<2x256xf32>
    tpu.vector_store %arg4[%c0_3, %c0_4], %3 {strides = array<i32>} : memref<2x256xf32, #tpu.memory_space<vmem>>, vector<2x256xf32>,
    return
  }
  func.func @transform_0(%arg0: i32, %arg1: i32) -> (i32, i32) {
    %c0_i32 = arith.constant 0 : i32
    return %arg0, %arg1 : i32, i32
  }
  func.func @transform_1(%arg0: i32, %arg1: i32) -> (i32, i32) {
    %c0_i32 = arith.constant 0 : i32
    %c0_i32_0 = arith.constant 0 : i32
    return %c0_i32, %arg1 : i32, i32
  }
  func.func @transform_2(%arg0: i32, %arg1: i32) -> (i32, i32) {
    %c0_i32 = arith.constant 0 : i32
    return %arg0, %arg1 : i32, i32
  }
}

</mosaic_0001>

<llo_original>
// kernel: tpu_custom_call.1
$region0: #{tpu_custom_call.1}
  #allocation0 [shape = 'u32[]', space=smem, size = 0x4, offset = 0x4, fixed_abs, tag = 'smem constant byte address 0x4 - core index']
  #allocation1 [shape = 'u32[144,128]{1,0:T(1,128)}', space=vmem, size = 0x12000, scoped, tag = 'internal scratch']
  %s0 = inlined_call_operand.hbm [shape: f32[2,256], index: 0, kind: input, shape index: {}]
  %s1 = inlined_call_operand.vmem [shape: f32[1,256], index: 1, kind: input, shape index: {}]
  %s2 = inlined_call_operand.hbm [shape: f32[2,256], index: 2, kind: output, shape index: {}]
  %s3 = sld [smem:[#allocation0]]
  $region22: #{tpu_custom_call.1} parent=0
    _
  %s5 = ssub.s32 1, %s3
  %s6 = scalar_select 0, %s5, %s3
  $region1: #{tpu_custom_call.1} parent=0
    #allocation2 [shape = 'u8[2048]{0}', space=vmem, size = 0x800, scoped, tag = 'input window, operand 0, single buffered']
    #allocation3 [shape = 's32[1]{0}', space=sflag, size = 0x4, scoped, tag = 'scoped memory for tpu_custom_call.1']
    #allocation4 [shape = 's32[1]{0}', space=sflag, size = 0x4, scoped, tag = 'scoped memory for tpu_custom_call.1']
    #allocation5 [shape = 'u8[2048]{0}', space=vmem, size = 0x800, scoped, tag = 'output window, operand 0, single buffered']
    %7 = vsyncpa [#allocation3], 0
    %8 = vsyncpa [#allocation4], 0
    // Predicated region
    $region2: #{tpu_custom_call.1} parent=1 // pred_check
      _
    $region3: #{tpu_custom_call.1} parent=1 // pred_check_branch
      %10 = sbr.rel (0) target = $region5
    $region4: #{tpu_custom_call.1} parent=1 // pred_region
      %s12 = ssub.s32 64, 64
      %13 = vsyncadd [#allocation3], %s12
      %s15 = sshll.u32 [#allocation2], 4
      %s16 = int_to_ptr.vmem [resolvable:$true] %s15
      %18 = dma.hbm_to_vmem [thread:$0]  %s0, 64, %s16, [#allocation3]
    $region5: #{tpu_custom_call.1} parent=1 // pred_fallthru
      _
    // Predicated region
    $region6: #{tpu_custom_call.1} parent=1 // pred_check
      _
    $region7: #{tpu_custom_call.1} parent=1 // pred_check_branch
      %20 = sbr.rel (0) target = $region9
    $region8: #{tpu_custom_call.1} parent=1 // pred_region
      _
    $region9: #{tpu_custom_call.1} parent=1 // pred_fallthru
      _
    // Predicated region
    $region10: #{tpu_custom_call.1} parent=1 // pred_check
      _
    $region11: #{tpu_custom_call.1} parent=1 // pred_check_branch
      %22 = sbr.rel (0) target = $region13
    $region12: #{tpu_custom_call.1} parent=1 // pred_region
      %23 = dma.done [#allocation3], 64
    $region13: #{tpu_custom_call.1} parent=1 // pred_fallthru
      _
    %v24 = vld [vmem:[#allocation2] sm:$0xf]
    %v25 = vld [vmem:[%s1] sm:$0x3]
    %v27 = vlaneseq
    %v28 = vshrl.u32 %v27, 7
    %v29 = vsub.s32 0, %v28
    %v30 = vrot.slane %v25, %v29
    %v31 = vlaneseq
    %v32 = vshrl.u32 %v31, 7
    %v33 = vsub.s32 1, %v32
    %v34 = vrot.slane %v25, %v33
    %v35 = vcombine.low %v30, %v34
    %v37 = vunpack.c.l.s4 1983009808
    %v38 = vunpack.c.0.s8 %v37
    %v39 = vlaneseq
    %v40 = vshrl.u32 %v39, 7
    %v41 = vsub.s32 %v38, %v40
    %v42 = vrot.slane %v35, %v41
    %v44 = vadd.f32 %v24, %v42
    %45 = vst [vmem:[#allocation5] sm:$0xf] %v44
    // Predicated region
    $region14: #{tpu_custom_call.1} parent=1 // pred_check
      _
    $region15: #{tpu_custom_call.1} parent=1 // pred_check_branch
      %47 = sbr.rel (0) target = $region17
    $region16: #{tpu_custom_call.1} parent=1 // pred_region
      %s49 = ssub.s32 64, 64
      %50 = vsyncadd [#allocation4], %s49
      %s52 = sshll.u32 [#allocation5], 4
      %s53 = int_to_ptr.vmem [resolvable:$true] %s52
      %55 = dma.vmem_to_hbm [thread:$0]  %s53, 64, %s2, [#allocation4]
    $region17: #{tpu_custom_call.1} parent=1 // pred_fallthru
      _
    // Predicated region
    $region18: #{tpu_custom_call.1} parent=1 // pred_check
      _
    $region19: #{tpu_custom_call.1} parent=1 // pred_check_branch
      %57 = sbr.rel (0) target = $region21
    $region20: #{tpu_custom_call.1} parent=1 // pred_region
      %58 = dma.done [#allocation4], 64
    $region21: #{tpu_custom_call.1} parent=1 // pred_fallthru
      _
    %59 = vsyncpa [#allocation3], 1
    %60 = vsyncpa [#allocation4], 1

</llo_original>
